<compile_context>
chip_gen: v6e
topology: v6e:2x2x1
jax: 0.10.0
libtpu: 0.0.40
codegen_flags: <defaults>
</compile_context>

<pallas_src>
import math
import functools

import jax
import jax.numpy as jnp
from jax import lax
from jax.experimental import pallas as pl
from jax.experimental.pallas import tpu as pltpu


def _attn_head_kernel(x_ref, w_ref, b_ref, mask_ref, out_ref, *, head_dim):
    # x_ref:    (1, T, H)    bf16   current batch element (resident across heads)
    # w_ref:    (1, H, 3d)   bf16   per-head packed [Wq_h/sqrt(d) | Wk_h | Wv_h]
    # b_ref:    (1, 1, 3d)   f32    per-head packed [bq_h/sqrt(d) | bk_h | bv_h]
    # mask_ref: (1, 1, T)    f32    additive padding mask for this batch
    # out_ref:  (1, 1, T, d) bf16   per-head context
    d = head_dim
    T = x_ref.shape[1]

    x = x_ref[0]                                             # (T, H) bf16

    # Per-head QKV projection slice: bf16 MXU operands, f32 accumulation.
    qkv = jnp.dot(x, w_ref[0], preferred_element_type=jnp.float32)   # (T, 3d)
    qkv = qkv + b_ref[0]                                     # + (1, 3d) bias

    # 1/sqrt(d) is already folded into Wq/bq at pack time.
    q = qkv[:, :d].astype(jnp.bfloat16)                      # (T, d)
    k = qkv[:, d:2 * d].astype(jnp.bfloat16)                 # (T, d)
    v = qkv[:, 2 * d:].astype(jnp.bfloat16)                  # (T, d)

    # Scores q @ k^T: (T, T), f32 accumulation.
    scores = lax.dot_general(q, k, (((1,), (1,)), ((), ())),
                             preferred_element_type=jnp.float32)

    # Fused causal (col > row) + padding mask, clamped at -1e4
    # (equivalent to torch: clamp(mask + triu*-1e4, min=-1e4) for mask <= 0).
    row = lax.broadcasted_iota(jnp.int32, (T, T), 0)
    col = lax.broadcasted_iota(jnp.int32, (T, T), 1)
    pad = jnp.maximum(mask_ref[0, 0, :].astype(jnp.float32),
                      jnp.float32(-10000.0))                 # (T,)
    causal = jnp.where(col > row, jnp.float32(-10000.0), pad[None, :])
    scores = scores + causal

    # Softmax in f32 with deferred normalization.
    m = jnp.max(scores, axis=-1, keepdims=True)              # (T, 1)
    e = jnp.exp(scores - m)                                  # (T, T) f32
    denom = jnp.sum(e, axis=-1, keepdims=True)               # (T, 1), >= 1

    ctx = jnp.dot(e.astype(jnp.bfloat16), v,
                  preferred_element_type=jnp.float32)        # (T, d) f32
    ctx = ctx * pl.reciprocal(denom, approx=True)            # EUP slot

    out_ref[0, 0] = ctx.astype(out_ref.dtype)


def pack_params(params, num_heads, hidden_size):
    """One-time packing: per-head (nh, H, 3d) bf16 weights, (nh, 1, 3d) f32 bias.

    nn.Linear weight is (out, in); we use (in, out) columns grouped per head,
    and fold the 1/sqrt(d) attention scale into the query weight/bias.
    """
    d = hidden_size // num_heads
    scale = 1.0 / math.sqrt(d)

    def per_head(w_t):                                       # (H, H) -> (nh, H, d)
        return w_t.reshape(hidden_size, num_heads, d).transpose(1, 0, 2)

    w_heads = jnp.concatenate(
        [per_head(params["wq"].T * scale),
         per_head(params["wk"].T),
         per_head(params["wv"].T)], axis=-1).astype(jnp.bfloat16)     # (nh, H, 3d)

    b_heads = jnp.concatenate(
        [(params["bq"] * scale).reshape(num_heads, 1, d),
         params["bk"].reshape(num_heads, 1, d),
         params["bv"].reshape(num_heads, 1, d)], axis=-1).astype(jnp.float32)

    return w_heads, b_heads


def causal_self_attention(hidden_states, attention_mask, packed, num_heads):
    """hidden_states: [B, T, H]; attention_mask: [B, 1, 1, T] -> [B, T, H]."""
    B, T, H = hidden_states.shape
    d = H // num_heads
    w_heads, b_heads = packed

    x_bf16 = hidden_states.astype(jnp.bfloat16)
    mask = attention_mask.reshape(B, 1, T).astype(jnp.float32)

    kernel = functools.partial(_attn_head_kernel, head_dim=d)

    grid_spec = pltpu.PrefetchScalarGridSpec(
        num_scalar_prefetch=0,
        grid=(B, num_heads),                                 # both parallel
        in_specs=[
            pl.BlockSpec((1, T, H), lambda b, h: (b, 0, 0)),       # x  (bf16)
            pl.BlockSpec((1, H, 3 * d), lambda b, h: (h, 0, 0)),   # W  (bf16)
            pl.BlockSpec((1, 1, 3 * d), lambda b, h: (h, 0, 0)),   # b  (f32)
            pl.BlockSpec((1, 1, T), lambda b, h: (b, 0, 0)),       # mask (f32)
        ],
        out_specs=pl.BlockSpec((1, 1, T, d), lambda b, h: (b, h, 0, 0)),
    )

    ctx = pl.pallas_call(
        kernel,
        out_shape=jax.ShapeDtypeStruct((B, num_heads, T, d), jnp.bfloat16),
        grid_spec=grid_spec,
        compiler_params=pltpu.CompilerParams(
            dimension_semantics=("parallel", "parallel"),
            # Per-step working set is small after the per-head split; 32 MiB
            # gives headroom on all generations (v5e default is only 16 MiB,
            # v7x physical VMEM is 64 MiB).
            vmem_limit_bytes=32 * 1024 * 1024,
        ),
    )(x_bf16, w_heads, b_heads, mask)

    # Merge heads back to [B, T, H] and restore the caller's dtype.
    out = ctx.transpose(0, 2, 1, 3).reshape(B, T, H)
    return out.astype(hidden_states.dtype)


def _reference(hidden_states, attention_mask, params, num_heads):
    """Pure-JAX f32 reference mirroring the PyTorch forward (eval mode)."""
    B, T, H = hidden_states.shape
    d = H // num_heads

    def proj(w, b):
        p = hidden_states @ w.T + b                          # (B, T, H)
        return p.reshape(B, T, num_heads, d).transpose(0, 2, 1, 3)

    q = proj(params["wq"], params["bq"])
    k = proj(params["wk"], params["bk"])
    v = proj(params["wv"], params["bv"])

    att = jnp.einsum("bhtd,bhsd->bhts", q, k) / math.sqrt(d)
    triu = jnp.triu(jnp.ones((T, T), jnp.float32), k=1)[None, None] * -10000.0
    causal = jnp.maximum(attention_mask + triu, -10000.0)
    att = att + causal
    att = jax.nn.softmax(att, axis=-1)
    out = jnp.einsum("bhts,bhsd->bhtd", att, v)
    return out.transpose(0, 2, 1, 3).reshape(B, T, H)


if __name__ == "__main__":
    # Small config: batch=2, seq=8, hidden=32, heads=4 (head_dim=8)
    B, T, H, NH = 2, 8, 32, 4

    key = jax.random.PRNGKey(0)
    keys = jax.random.split(key, 8)

    bound = 1.0 / math.sqrt(H)
    params = {
        "wq": jax.random.uniform(keys[0], (H, H), jnp.float32, -bound, bound),
        "wk": jax.random.uniform(keys[1], (H, H), jnp.float32, -bound, bound),
        "wv": jax.random.uniform(keys[2], (H, H), jnp.float32, -bound, bound),
        "bq": jax.random.uniform(keys[3], (H,), jnp.float32, -bound, bound),
        "bk": jax.random.uniform(keys[4], (H,), jnp.float32, -bound, bound),
        "bv": jax.random.uniform(keys[5], (H,), jnp.float32, -bound, bound),
    }

    hidden_states = jax.random.normal(keys[6], (B, T, H), jnp.float32)
    # additive attention mask: 0 for valid tokens, -10000 for padded tokens
    valid_len = jnp.array([T, T - 2])
    pos = jnp.arange(T)[None, :]
    attention_mask = jnp.where(pos < valid_len[:, None], 0.0, -10000.0)
    attention_mask = attention_mask.reshape(B, 1, 1, T).astype(jnp.float32)

    # Pack weights once (outside the per-call path).
    packed = pack_params(params, NH, H)

    out = causal_self_attention(hidden_states, attention_mask, packed, NH)
    out = jax.block_until_ready(out)

    ref = _reference(hidden_states, attention_mask, params, NH)
    assert out.shape == (B, T, H)
    # bf16 MXU operands / bf16 ctx writeback (f32 accumulation) -> loosened
    # tolerance vs the f32 reference.
    assert jnp.allclose(out.astype(jnp.float32), ref, atol=3e-2, rtol=3e-2), \
        "mismatch vs reference"

    print("KERNEL_OK")
</pallas_src>

<mosaic_0001>
module attributes {stable_mosaic.version = 11 : i64} {
  func.func @_attn_head_kernel(%arg0: i32, %arg1: i32, %arg2: memref<1x8x32xbf16, #tpu.memory_space<vmem>>, %arg3: memref<1x32x24xbf16, #tpu.memory_space<vmem>>, %arg4: memref<1x1x24xf32, #tpu.memory_space<vmem>>, %arg5: memref<1x1x8xf32, #tpu.memory_space<vmem>>, %arg6: memref<1x1x8x8xbf16, #tpu.memory_space<vmem>>) attributes {dimension_semantics = [#tpu.dimension_semantics<parallel>, #tpu.dimension_semantics<parallel>], iteration_bounds = array<i64: 2, 4>, scalar_prefetch = 0 : i64, scratch_operands = 0 : i64, tpu.core_type = #tpu.core_type<tc>, window_params = [{transform_indices = @transform_0, window_bounds = array<i64: 1, 8, 32>}, {transform_indices = @transform_1, window_bounds = array<i64: 1, 32, 24>}, {transform_indices = @transform_2, window_bounds = array<i64: 1, 1, 24>}, {transform_indices = @transform_3, window_bounds = array<i64: 1, 1, 8>}, {transform_indices = @transform_4, window_bounds = array<i64: 1, 1, 8, 8>}]} {
    %c0 = arith.constant 0 : index
    %c0_0 = arith.constant 0 : index
    %c0_1 = arith.constant 0 : index
    %0 = vector.load %arg2[%c0, %c0_0, %c0_1] : memref<1x8x32xbf16, #tpu.memory_space<vmem>>, vector<1x8x32xbf16>
    %1 = vector.shape_cast %0 : vector<1x8x32xbf16> to vector<8x32xbf16>
    %c0_2 = arith.constant 0 : index
    %c0_3 = arith.constant 0 : index
    %c0_4 = arith.constant 0 : index
    %2 = vector.load %arg3[%c0_2, %c0_3, %c0_4] : memref<1x32x24xbf16, #tpu.memory_space<vmem>>, vector<1x32x24xbf16>
    %3 = vector.shape_cast %2 : vector<1x32x24xbf16> to vector<32x24xbf16>
    %cst = arith.constant dense<0.000000e+00> : vector<8x24xf32>
    %4 = tpu.matmul %1, %3, %cst {dimension_numbers = #tpu.dot_dimension_numbers<[1], [0], [0], [1], [0, 0, 1, 1], [], []>} : vector<8x32xbf16>, vector<32x24xbf16>, vector<8x24xf32> -> vector<8x24xf32>
    %c0_5 = arith.constant 0 : index
    %c0_6 = arith.constant 0 : index
    %c0_7 = arith.constant 0 : index
    %5 = vector.load %arg4[%c0_5, %c0_6, %c0_7] : memref<1x1x24xf32, #tpu.memory_space<vmem>>, vector<1x1x24xf32>
    %6 = vector.shape_cast %5 : vector<1x1x24xf32> to vector<1x24xf32>
    %7 = vector.broadcast %6 : vector<1x24xf32> to vector<8x24xf32>
    %8 = arith.addf %4, %7 : vector<8x24xf32>
    %9 = vector.extract_strided_slice %8 {offsets = [0, 0], sizes = [8, 8], strides = [1, 1]} : vector<8x24xf32> to vector<8x8xf32>
    %10 = arith.truncf %9 : vector<8x8xf32> to vector<8x8xbf16>
    %11 = vector.extract_strided_slice %8 {offsets = [0, 8], sizes = [8, 8], strides = [1, 1]} : vector<8x24xf32> to vector<8x8xf32>
    %12 = arith.truncf %11 : vector<8x8xf32> to vector<8x8xbf16>
    %13 = vector.extract_strided_slice %8 {offsets = [0, 16], sizes = [8, 8], strides = [1, 1]} : vector<8x24xf32> to vector<8x8xf32>
    %14 = arith.truncf %13 : vector<8x8xf32> to vector<8x8xbf16>
    %cst_8 = arith.constant dense<0.000000e+00> : vector<8x8xf32>
    %15 = tpu.matmul %10, %12, %cst_8 {dimension_numbers = #tpu.dot_dimension_numbers<[1], [1], [0], [0], [0, 0, 1, 0], [], []>} : vector<8x8xbf16>, vector<8x8xbf16>, vector<8x8xf32> -> vector<8x8xf32>
    %16 = tpu.iota {dimensions = array<i32: 0>} : vector<8x8xi32>
    %17 = tpu.iota {dimensions = array<i32: 1>} : vector<8x8xi32>
    %c0_9 = arith.constant 0 : index
    %c0_10 = arith.constant 0 : index
    %c0_11 = arith.constant 0 : index
    %18 = vector.load %arg5[%c0_9, %c0_10, %c0_11] : memref<1x1x8xf32, #tpu.memory_space<vmem>>, vector<1x1x8xf32>
    %19 = vector.shape_cast %18 : vector<1x1x8xf32> to vector<8xf32>
    %cst_12 = arith.constant -1.000000e+04 : f32
    %20 = vector.broadcast %cst_12 : f32 to vector<8xf32>
    %21 = arith.maximumf %19, %20 : vector<8xf32>
    %22 = arith.cmpi sgt, %17, %16 : vector<8x8xi32>
    %23 = vector.shape_cast %21 : vector<8xf32> to vector<1x8xf32>
    %cst_13 = arith.constant -1.000000e+04 : f32
    %24 = vector.broadcast %cst_13 : f32 to vector<8x8xf32>
    %25 = vector.shape_cast %23 : vector<1x8xf32> to vector<1x8xf32>
    %26 = vector.broadcast %25 : vector<1x8xf32> to vector<8x8xf32>
    %27 = arith.select %22, %24, %26 : vector<8x8xi1>, vector<8x8xf32>
    %28 = arith.addf %15, %27 : vector<8x8xf32>
    %cst_14 = arith.constant dense<0xFF800000> : vector<8xf32>
    %29 = vector.multi_reduction <maximumf>, %28, %cst_14 [1] : vector<8x8xf32> to vector<8xf32>
    %30 = vector.shape_cast %29 : vector<8xf32> to vector<8x1xf32>
    %31 = vector.broadcast %30 : vector<8x1xf32> to vector<8x8xf32>
    %32 = arith.subf %28, %31 : vector<8x8xf32>
    %33 = math.exp %32 : vector<8x8xf32>
    %cst_15 = arith.constant dense<0.000000e+00> : vector<8xf32>
    %34 = vector.multi_reduction <add>, %33, %cst_15 [1] : vector<8x8xf32> to vector<8xf32>
    %35 = vector.shape_cast %34 : vector<8xf32> to vector<8x1xf32>
    %36 = arith.truncf %33 : vector<8x8xf32> to vector<8x8xbf16>
    %cst_16 = arith.constant dense<0.000000e+00> : vector<8x8xf32>
    %37 = tpu.matmul %36, %14, %cst_16 {dimension_numbers = #tpu.dot_dimension_numbers<[1], [0], [0], [1], [0, 0, 1, 1], [], []>} : vector<8x8xbf16>, vector<8x8xbf16>, vector<8x8xf32> -> vector<8x8xf32>
    %38 = tpu.reciprocal %35 {approx = true} : vector<8x1xf32> -> vector<8x1xf32>
    %39 = vector.broadcast %38 : vector<8x1xf32> to vector<8x8xf32>
    %40 = arith.mulf %37, %39 : vector<8x8xf32>
    %41 = arith.truncf %40 : vector<8x8xf32> to vector<8x8xbf16>
    %c0_17 = arith.constant 0 : index
    %c0_18 = arith.constant 0 : index
    %c0_19 = arith.constant 0 : index
    %c0_20 = arith.constant 0 : index
    %42 = vector.load %arg6[%c0_17, %c0_18, %c0_19, %c0_20] : memref<1x1x8x8xbf16, #tpu.memory_space<vmem>>, vector<1x1x8x8xbf16>
    %43 = vector.shape_cast %42 : vector<1x1x8x8xbf16> to vector<8x8xbf16>
    %44 = vector.shape_cast %41 : vector<8x8xbf16> to vector<1x1x8x8xbf16>
    tpu.vector_store %arg6[%c0_17, %c0_18, %c0_19, %c0_20], %44 {strides = array<i32>} : memref<1x1x8x8xbf16, #tpu.memory_space<vmem>>, vector<1x1x8x8xbf16>,
    return
  }
  func.func @transform_0(%arg0: i32, %arg1: i32) -> (i32, i32, i32) {
    %c0_i32 = arith.constant 0 : i32
    %c0_i32_0 = arith.constant 0 : i32
    %c0_i32_1 = arith.constant 0 : i32
    return %arg0, %c0_i32, %c0_i32_0 : i32, i32, i32
  }
  func.func @transform_1(%arg0: i32, %arg1: i32) -> (i32, i32, i32) {
    %c0_i32 = arith.constant 0 : i32
    %c0_i32_0 = arith.constant 0 : i32
    %c0_i32_1 = arith.constant 0 : i32
    return %arg1, %c0_i32, %c0_i32_0 : i32, i32, i32
  }
  func.func @transform_2(%arg0: i32, %arg1: i32) -> (i32, i32, i32) {
    %c0_i32 = arith.constant 0 : i32
    %c0_i32_0 = arith.constant 0 : i32
    %c0_i32_1 = arith.constant 0 : i32
    return %arg1, %c0_i32, %c0_i32_0 : i32, i32, i32
  }
  func.func @transform_3(%arg0: i32, %arg1: i32) -> (i32, i32, i32) {
    %c0_i32 = arith.constant 0 : i32
    %c0_i32_0 = arith.constant 0 : i32
    %c0_i32_1 = arith.constant 0 : i32
    return %arg0, %c0_i32, %c0_i32_0 : i32, i32, i32
  }
  func.func @transform_4(%arg0: i32, %arg1: i32) -> (i32, i32, i32, i32) {
    %c0_i32 = arith.constant 0 : i32
    %c0_i32_0 = arith.constant 0 : i32
    %c0_i32_1 = arith.constant 0 : i32
    return %arg0, %arg1, %c0_i32, %c0_i32_0 : i32, i32, i32, i32
  }
}

</mosaic_0001>

<llo_original>
// kernel: tpu_custom_call.1
$region0: #{tpu_custom_call.1}
  #allocation0 [shape = 'u32[]', space=smem, size = 0x4, offset = 0x4, fixed_abs, tag = 'smem constant byte address 0x4 - core index']
  #allocation1 [shape = 'u32[144,128]{1,0:T(1,128)}', space=vmem, size = 0x12000, scoped, tag = 'internal scratch']
  %s0 = inlined_call_operand.vmem [shape: bf16[2,8,32], index: 0, kind: input, shape index: {}]
  %s1 = inlined_call_operand.vmem [shape: bf16[4,32,24], index: 1, kind: input, shape index: {}]
  %s2 = inlined_call_operand.vmem [shape: f32[4,1,24], index: 2, kind: input, shape index: {}]
  %s3 = inlined_call_operand.vmem [shape: f32[2,1,8], index: 3, kind: input, shape index: {}]
  %s4 = inlined_call_operand.hbm [shape: bf16[2,4,8,8], index: 4, kind: output, shape index: {}]
  %s5 = sld [smem:[#allocation0]]
  $region49: #{tpu_custom_call.1} parent=0
    _
  %s7 = ssub.s32 1, %s5
  %s8 = scalar_select 0, %s7, %s5
  $region1: #{tpu_custom_call.1} parent=0
    #allocation2 [shape = 'u8[4096]{0}', space=vmem, size = 0x1000, scoped, tag = 'output window, operand 0']
    #allocation3 [shape = 's32[2]{0}', space=sflag, size = 0x8, scoped, tag = 'scoped memory for tpu_custom_call.1']
    %9 = vsyncpa [#allocation3], 0
    %s10 = scalar_lea.sflag [#allocation3], 1
    %11 = vsyncpa %s10, 0
    loop: start=0, step=1, limit=10
    $region2: #{tpu_custom_call.1} parent=1 // loop_pre_header
      _
    $region3: #{tpu_custom_call.1} parent=1 // loop_header
      %s13 = sphi 0, %s17
      %p14 = scmp.ge.s32.totalorder %s13, 10
      %s20 = sphi 0, %s32
      %s21 = sphi 0, %s28
      %s22 = sphi 0, %s20
      %s23 = sphi 0, %s21
      %s24 = sphi 0, %s22
      %s25 = sphi 0, %s23
      %s35 = sphi 0, %s37
      %s38 = sphi 0, %s35
      %s39 = sphi 0, %s38
      %s55 = sphi 0, %s39
      %s61 = sphi 0, %s63
      %s64 = sphi 0, %s61
      %s65 = sphi 0, %s64
      %s81 = sphi 0, %s65
      %s87 = sphi 0, %s89
      %s90 = sphi 0, %s87
      %s91 = sphi 0, %s90
      %s107 = sphi 0, %s91
      %s113 = sphi 0, %s115
      %s116 = sphi 0, %s113
      %s117 = sphi 0, %s116
      %s133 = sphi 0, %s117
      %s141 = sphi 0, %s143
      %s144 = sphi 0, %s141
      %s145 = sphi 0, %s144
      %s161 = sphi 0, %s145
    $region4: #{tpu_custom_call.1} parent=1 // loop_header_branch
      %16 = sbr.rel (%p14) target = $region8
    $region5: #{tpu_custom_call.1} parent=1 // loop_body
      %s18 = ssub.s32 %s13, 1
      %s19 = ssub.s32 %s13, 2
      %s26 = sadd.s32 1, %s21
      %p27 = scmp.ge.s32.totalorder %s26, 4
      %s28 = scalar_select %p27, 0, %s26
      %s29 = sadd.s32 1, %s20
      %s30 = scalar_select %p27, %s29, %s20
      %p31 = scmp.ge.s32.totalorder %s30, 2
      %s32 = scalar_select %p31, 0, %s30
      %s33 = ssub.s32 %s20, %s32
      %p34 = scmp.eq.s32.totalorder %s33, 0
      %s36 = sadd.s32 %s35, 1
      %s37 = scalar_select %p34, %s35, %s36
      %p40 = pneg %p34
      %p41 = scmp.eq.s32.totalorder %s13, 7
      %p42 = por %p40, %p41
      %p43 = scmp.ne.s32.totalorder %s35, %s38
      %p44 = scmp.eq.s32.totalorder %s13, 0
      %p45 = por %p43, %p44
      %p46 = scmp.ne.s32.totalorder %s35, %s38
      %p47 = scmp.eq.s32.totalorder %s18, 7
      %p48 = por %p46, %p47
      %p49 = scmp.ne.s32.totalorder %s38, %s39
      %p50 = scmp.eq.s32.totalorder %s18, 0
      %p51 = por %p49, %p50
      %p52 = scmp.ne.s32.totalorder %s38, %s39
      %p53 = scmp.eq.s32.totalorder %s19, 7
      %p54 = por %p52, %p53
      %p56 = scmp.ne.s32.totalorder %s39, %s55
      %p57 = scmp.eq.s32.totalorder %s19, 0
      %p58 = por %p56, %p57
      %s59 = ssub.s32 %s21, %s28
      %p60 = scmp.eq.s32.totalorder %s59, 0
      %s62 = sadd.s32 %s61, 1
      %s63 = scalar_select %p60, %s61, %s62
      %p66 = pneg %p60
      %p67 = scmp.eq.s32.totalorder %s13, 7
      %p68 = por %p66, %p67
      %p69 = scmp.ne.s32.totalorder %s61, %s64
      %p70 = scmp.eq.s32.totalorder %s13, 0
      %p71 = por %p69, %p70
      %p72 = scmp.ne.s32.totalorder %s61, %s64
      %p73 = scmp.eq.s32.totalorder %s18, 7
      %p74 = por %p72, %p73
      %p75 = scmp.ne.s32.totalorder %s64, %s65
      %p76 = scmp.eq.s32.totalorder %s18, 0
      %p77 = por %p75, %p76
      %p78 = scmp.ne.s32.totalorder %s64, %s65
      %p79 = scmp.eq.s32.totalorder %s19, 7
      %p80 = por %p78, %p79
      %p82 = scmp.ne.s32.totalorder %s65, %s81
      %p83 = scmp.eq.s32.totalorder %s19, 0
      %p84 = por %p82, %p83
      %s85 = ssub.s32 %s21, %s28
      %p86 = scmp.eq.s32.totalorder %s85, 0
      %s88 = sadd.s32 %s87, 1
      %s89 = scalar_select %p86, %s87, %s88
      %p92 = pneg %p86
      %p93 = scmp.eq.s32.totalorder %s13, 7
      %p94 = por %p92, %p93
      %p95 = scmp.ne.s32.totalorder %s87, %s90
      %p96 = scmp.eq.s32.totalorder %s13, 0
      %p97 = por %p95, %p96
      %p98 = scmp.ne.s32.totalorder %s87, %s90
      %p99 = scmp.eq.s32.totalorder %s18, 7
      %p100 = por %p98, %p99
      %p101 = scmp.ne.s32.totalorder %s90, %s91
      %p102 = scmp.eq.s32.totalorder %s18, 0
      %p103 = por %p101, %p102
      %p104 = scmp.ne.s32.totalorder %s90, %s91
      %p105 = scmp.eq.s32.totalorder %s19, 7
      %p106 = por %p104, %p105
      %p108 = scmp.ne.s32.totalorder %s91, %s107
      %p109 = scmp.eq.s32.totalorder %s19, 0
      %p110 = por %p108, %p109
      %s111 = ssub.s32 %s20, %s32
      %p112 = scmp.eq.s32.totalorder %s111, 0
      %s114 = sadd.s32 %s113, 1
      %s115 = scalar_select %p112, %s113, %s114
      %p118 = pneg %p112
      %p119 = scmp.eq.s32.totalorder %s13, 7
      %p120 = por %p118, %p119
      %p121 = scmp.ne.s32.totalorder %s113, %s116
      %p122 = scmp.eq.s32.totalorder %s13, 0
      %p123 = por %p121, %p122
      %p124 = scmp.ne.s32.totalorder %s113, %s116
      %p125 = scmp.eq.s32.totalorder %s18, 7
      %p126 = por %p124, %p125
      %p127 = scmp.ne.s32.totalorder %s116, %s117
      %p128 = scmp.eq.s32.totalorder %s18, 0
      %p129 = por %p127, %p128
      %p130 = scmp.ne.s32.totalorder %s116, %s117
      %p131 = scmp.eq.s32.totalorder %s19, 7
      %p132 = por %p130, %p131
      %p134 = scmp.ne.s32.totalorder %s117, %s133
      %p135 = scmp.eq.s32.totalorder %s19, 0
      %p136 = por %p134, %p135
      %s137 = ssub.s32 %s20, %s32
      %s138 = ssub.s32 %s21, %s28
      %s139 = sor.u32 %s137, %s138
      %p140 = scmp.eq.s32.totalorder %s139, 0
      %s142 = sadd.s32 %s141, 1
      %s143 = scalar_select %p140, %s141, %s142
      %p146 = pneg %p140
      %p147 = scmp.eq.s32.totalorder %s13, 7
      %p148 = por %p146, %p147
      %p149 = scmp.ne.s32.totalorder %s141, %s144
      %p150 = scmp.eq.s32.totalorder %s13, 0
      %p151 = por %p149, %p150
      %p152 = scmp.ne.s32.totalorder %s141, %s144
      %p153 = scmp.eq.s32.totalorder %s18, 7
      %p154 = por %p152, %p153
      %p155 = scmp.ne.s32.totalorder %s144, %s145
      %p156 = scmp.eq.s32.totalorder %s18, 0
      %p157 = por %p155, %p156
      %p158 = scmp.ne.s32.totalorder %s144, %s145
      %p159 = scmp.eq.s32.totalorder %s19, 7
      %p160 = por %p158, %p159
      %p162 = scmp.ne.s32.totalorder %s145, %s161
      %p163 = scmp.eq.s32.totalorder %s19, 0
      %p164 = por %p162, %p163
      %p165 = scmp.le.s32.totalorder 1, %s13
      %p166 = scmp.lt.s32.totalorder %s13, 9
      %p167 = pnand %p165, %p166
      %p168 = pneg %p167
      // Predicated region
      $region9: #{tpu_custom_call.1} parent=5 // pred_check
        _
      $region10: #{tpu_custom_call.1} parent=5 // pred_check_branch
        %170 = sbr.rel (%p167) target = $region12
      $region11: #{tpu_custom_call.1} parent=5 // pred_region
        %s171 = ssub.s32 %s13, 1
      $region12: #{tpu_custom_call.1} parent=5 // pred_fallthru
        _
      %p172 = scmp.lt.s32.totalorder %s13, 8
      // Predicated region
      $region13: #{tpu_custom_call.1} parent=5 // pred_check
        %p173 = pneg %p172
      $region14: #{tpu_custom_call.1} parent=5 // pred_check_branch
        %175 = sbr.rel (%p173) target = $region16
      $region15: #{tpu_custom_call.1} parent=5 // pred_region
        // Predicated region
        $region17: #{tpu_custom_call.1} parent=15 // pred_check
          %p176 = pneg %p45
        $region18: #{tpu_custom_call.1} parent=15 // pred_check_branch
          %178 = sbr.rel (%p176) target = $region20
        $region19: #{tpu_custom_call.1} parent=15 // pred_region
          %p179 = scmp.lt.s32.totalorder %s20, 1
          %s180 = scalar_select %p179, %s20, 1
          %s181 = smul.addr %s180, 4
          %s182 = scalar_lea.vmem %s0, %s181
        $region20: #{tpu_custom_call.1} parent=15 // pred_fallthru
          _
        // Predicated region
        $region21: #{tpu_custom_call.1} parent=15 // pred_check
          %p183 = pneg %p71
        $region22: #{tpu_custom_call.1} parent=15 // pred_check_branch
          %185 = sbr.rel (%p183) target = $region24
        $region23: #{tpu_custom_call.1} parent=15 // pred_region
          %p186 = scmp.lt.s32.totalorder %s21, 3
          %s187 = scalar_select %p186, %s21, 3
          %s188 = smul.addr %s187, 4
          %s189 = smul.addr %s188, 4
          %s190 = scalar_lea.vmem %s1, %s189
        $region24: #{tpu_custom_call.1} parent=15 // pred_fallthru
          _
        // Predicated region
        $region25: #{tpu_custom_call.1} parent=15 // pred_check
          %p191 = pneg %p97
        $region26: #{tpu_custom_call.1} parent=15 // pred_check_branch
          %193 = sbr.rel (%p191) target = $region28
        $region27: #{tpu_custom_call.1} parent=15 // pred_region
          %p194 = scmp.lt.s32.totalorder %s21, 3
          %s195 = scalar_select %p194, %s21, 3
          %s196 = scalar_lea.vmem %s2, %s195
        $region28: #{tpu_custom_call.1} parent=15 // pred_fallthru
          _
        // Predicated region
        $region29: #{tpu_custom_call.1} parent=15 // pred_check
          %p197 = pneg %p123
        $region30: #{tpu_custom_call.1} parent=15 // pred_check_branch
          %199 = sbr.rel (%p197) target = $region32
        $region31: #{tpu_custom_call.1} parent=15 // pred_region
          %p200 = scmp.lt.s32.totalorder %s20, 1
          %s201 = scalar_select %p200, %s20, 1
          %s202 = scalar_lea.vmem %s3, %s201
        $region32: #{tpu_custom_call.1} parent=15 // pred_fallthru
          _
      $region16: #{tpu_custom_call.1} parent=5 // pred_fallthru
        _
      %p203 = scmp.le.s32.totalorder 1, %s13
      %p204 = scmp.lt.s32.totalorder %s13, 9
      %p205 = pnand %p203, %p204
      %p206 = pneg %p205
      // Predicated region
      $region33: #{tpu_custom_call.1} parent=5 // pred_check
        _
      $region34: #{tpu_custom_call.1} parent=5 // pred_check_branch
        %208 = sbr.rel (%p205) target = $region36
      $region35: #{tpu_custom_call.1} parent=5 // pred_region
        %s209 = ssub.s32 %s13, 1
        %p210 = scmp.lt.s32.totalorder %s22, 1
        %s211 = scalar_select %p210, %s22, 1
        %s212 = smul.addr %s211, 4
        %s213 = scalar_lea.vmem %s0, %s212
        %p214 = pneg %p51
        %p215 = pneg %p48
        %p216 = scmp.lt.s32.totalorder %s23, 3
        %s217 = scalar_select %p216, %s23, 3
        %s218 = smul.addr %s217, 4
        %s219 = smul.addr %s218, 4
        %s220 = scalar_lea.vmem %s1, %s219
        %p221 = pneg %p77
        %p222 = pneg %p74
        %p223 = scmp.lt.s32.totalorder %s23, 3
        %s224 = scalar_select %p223, %s23, 3
        %s225 = scalar_lea.vmem %s2, %s224
        %p226 = pneg %p103
        %p227 = pneg %p100
        %p228 = scmp.lt.s32.totalorder %s22, 1
        %s229 = scalar_select %p228, %s22, 1
        %s230 = scalar_lea.vmem %s3, %s229
        %p231 = pneg %p129
        %p232 = pneg %p126
        %p233 = pneg %p157
        %p234 = pneg %p154
        %s235 = sand.u32 %s144, 1
        %s236 = scalar_lea.sflag [#allocation3], %s235
        %s237 = sand.u32 %s144, 1
        %s238 = smul.addr %s237, 4
        %s239 = scalar_lea.vmem [#allocation2], %s238
        %p240 = scmp.lt.s32.totalorder %s22, 1
        %s241 = scalar_select %p240, %s22, 1
        %s242 = smul.addr %s241, 4
        %s243 = scalar_lea.vmem %s0, %s242
        %p244 = scmp.lt.s32.totalorder %s23, 3
        %s245 = scalar_select %p244, %s23, 3
        %s246 = smul.addr %s245, 4
        %s247 = smul.addr %s246, 4
        %s248 = scalar_lea.vmem %s1, %s247
        %p249 = scmp.lt.s32.totalorder %s23, 3
        %s250 = scalar_select %p249, %s23, 3
        %s251 = scalar_lea.vmem %s2, %s250
        %p252 = scmp.lt.s32.totalorder %s22, 1
        %s253 = scalar_select %p252, %s22, 1
        %s254 = scalar_lea.vmem %s3, %s253
        %v256 = vld [vmem:[%s243] sm:$0xf]
        %v257 = vld [vmem:[%s248] sm:$0xf]
        %v258 = vld [vmem:[%s248 + $0x4] sm:$0xf]
        %v259 = vld [vmem:[%s248 + $0x8] sm:$0xf]
        %v260 = vld [vmem:[%s248 + $0xc] sm:$0xf]
        %v261 = vld [vmem:[%s251] sm:$0x1]
        %v263 = vlaneseq
        %v264 = vshrl.u32 %v263, 7
        %v265 = vsub.s32 0, %v264
        %v266 = vrot.slane %v261, %v265
        %v272 = vunpack.c.l.b16 %v257
        %v273 = vunpack.c.l.b16 %v258
        %v274 = vunpack.c.l.b16 %v259
        %v275 = vunpack.c.l.b16 %v260
        %v276 = vpack.c.b16 %v273, %v272
        %v277 = vpack.c.b16 %v275, %v274
        %vm280 = vcmask 261120
        %v282 = vsel %vm280, %v256, 0
        %284 = vmatprep.subr.bf16.mxu0 0
        %285 = vmatpush1.bf16.msra.mxu0 0
        %286 = vmatprep.subr.bf16.mxu0 0
        %287 = vmatpush1.bf16.msra.mxu0 0
        %288 = vmatprep.subr.bf16.mxu0 0
        %289 = vmatpush1.bf16.msra.mxu0 0
        %290 = vmatprep.subr.bf16.mxu0 0
        %291 = vmatpush1.bf16.msra.mxu0 0
        %292 = vmatprep.subr.bf16.mxu0 0
        %293 = vmatpush1.bf16.msra.mxu0 0
        %294 = vmatprep.subr.bf16.mxu0 0
        %295 = vmatpush1.bf16.msra.mxu0 0
        %296 = vmatprep.subr.bf16.mxu0 0
        %297 = vmatpush1.bf16.msra.mxu0 %v277
        %298 = vmatprep.subr.bf16.mxu0 0
        %299 = vmatpush1.bf16.msra.mxu0 %v276
        %300 = vmatprep.subr.bf16.mxu0 0
        %301 = vmatpush2.bf16.msra.mxu0 0
        %302 = vmatprep.subr.bf16.mxu0 0
        %303 = vmatpush2.bf16.msra.mxu0 0
        %304 = vmatprep.subr.bf16.mxu0 0
        %305 = vmatpush2.bf16.msra.mxu0 0
        %306 = vmatprep.subr.bf16.mxu0 0
        %307 = vmatpush2.bf16.msra.mxu0 0
        %308 = vmatprep.subr.bf16.mxu0 0
        %309 = vmatpush2.bf16.msra.mxu0 0
        %310 = vmatprep.subr.bf16.mxu0 0
        %311 = vmatpush2.bf16.msra.mxu0 0
        %312 = vmatprep.subr.bf16.mxu0 0
        %313 = vmatpush2.bf16.msra.mxu0 0
        %314 = vmatprep.subr.bf16.mxu0 0
        %315 = vmatpush2.bf16.msra.mxu0 0
        %316 = vmatprep.mubr.bf16.mxu0 0
        %317 = vmatmul.mubr.bf16.gmra.mxu0 %v282
        %v318 = vpop.f32.mrf.mxu0
        %v319 = vadd.f32 %v266, %v318
        %v320 = vpop.f32.mrf.mxu0
        %v321 = vpop.f32.mrf.mxu0
        %v322 = vpop.f32.mrf.mxu0
        %323 = vdwg.mxu0
        %v324 = vpack.c.bf16 %v319, %v319
        %v325 = vlaneseq
        %v326 = vshrl.u32 %v325, 7
        %v327 = vlaneseq
        %v328 = vand.u32 %v327, 127
        %v329 = vld [vmem:[%s254] sm:$0x1]
        %v330 = vmax.f32 %v329, -10000.0
        %vm331 = vcmp.gt.s32.totalorder %v328, %v326
        %v333 = vlaneseq
        %v334 = vshrl.u32 %v333, 7
        %v335 = vsub.s32 0, %v334
        %v336 = vrot.slane %v330, %v335
        %v338 = vsel %vm331, -10000.0, %v336
        %340 = vrot.lane.b32.xlu0 %v324, 120
        %v341 = vpop.permute.xlu0 %340
        %vm342 = vcmask 64512
        %v344 = vsel %vm342, %v324, 0
        %v347 = vsel %vm342, %v341, 0
        %349 = vmatprep.subr.bf16.mxu0 0
        %350 = vmatpush1.bf16.xpose.msra.mxu0 0
        %351 = vmatprep.subr.bf16.mxu0 0
        %352 = vmatpush1.bf16.xpose.msra.mxu0 0
        %353 = vmatprep.subr.bf16.mxu0 0
        %354 = vmatpush1.bf16.xpose.msra.mxu0 0
        %355 = vmatprep.subr.bf16.mxu0 0
        %356 = vmatpush1.bf16.xpose.msra.mxu0 0
        %357 = vmatprep.subr.bf16.mxu0 0
        %358 = vmatpush1.bf16.xpose.msra.mxu0 0
        %359 = vmatprep.subr.bf16.mxu0 0
        %360 = vmatpush1.bf16.xpose.msra.mxu0 0
        %361 = vmatprep.subr.bf16.mxu0 0
        %362 = vmatpush1.bf16.xpose.msra.mxu0 0
        %363 = vmatprep.subr.bf16.mxu0 0
        %364 = vmatpush1.bf16.xpose.msra.mxu0 %v347
        %365 = vmatprep.subr.bf16.mxu0 0
        %366 = vmatpush2.bf16.xpose.msra.mxu0 0
        %367 = vmatprep.subr.bf16.mxu0 0
        %368 = vmatpush2.bf16.xpose.msra.mxu0 0
        %369 = vmatprep.subr.bf16.mxu0 0
        %370 = vmatpush2.bf16.xpose.msra.mxu0 0
        %371 = vmatprep.subr.bf16.mxu0 0
        %372 = vmatpush2.bf16.xpose.msra.mxu0 0
        %373 = vmatprep.subr.bf16.mxu0 0
        %374 = vmatpush2.bf16.xpose.msra.mxu0 0
        %375 = vmatprep.subr.bf16.mxu0 0
        %376 = vmatpush2.bf16.xpose.msra.mxu0 0
        %377 = vmatprep.subr.bf16.mxu0 0
        %378 = vmatpush2.bf16.xpose.msra.mxu0 0
        %379 = vmatprep.subr.bf16.mxu0 0
        %380 = vmatpush2.bf16.xpose.msra.mxu0 0
        %381 = vmatprep.mubr.bf16.mxu0 0
        %382 = vmatmul.mubr.bf16.gmra.mxu0 %v344
        %v383 = vpop.f32.mrf.mxu0
        %v384 = vadd.f32 %v338, %v383
        %v385 = vpop.f32.mrf.mxu0
        %v386 = vpop.f32.mrf.mxu0
        %v387 = vpop.f32.mrf.mxu0
        %388 = vdwg.mxu0
        %v389 = vsel %vm342, %v384, -inf
        %390 = vmax.xlane.f32.xlu0 %v389
        %v391 = vpop.xlane.xlu0 %390
        %v392 = vsub.f32 %v384, %v391
        %v393 = vmul.f32 %v392, 1.442695
        %v394 = vpow.pop %v393
        %v395 = vsel %vm342, %v394, 0.0
        %396 = vadd.xlane.f32.xlu0 %v395
        %v397 = vpop.xlane.xlu0 %396
        %v398 = vpack.c.bf16 %v394, %v394
        %399 = vrot.lane.b32.xlu0 %v324, 112
        %v400 = vpop.permute.xlu0 %399
        %v402 = vsel %vm342, %v398, 0
        %vm404 = vcmask 1043456
        %v406 = vsel %vm404, %v400, 0
        %408 = vmatprep.subr.bf16.mxu0 0
        %409 = vmatpush1.bf16.msra.mxu0 0
        %410 = vmatprep.subr.bf16.mxu0 0
        %411 = vmatpush1.bf16.msra.mxu0 0
        %412 = vmatprep.subr.bf16.mxu0 0
        %413 = vmatpush1.bf16.msra.mxu0 0
        %414 = vmatprep.subr.bf16.mxu0 0
        %415 = vmatpush1.bf16.msra.mxu0 0
        %416 = vmatprep.subr.bf16.mxu0 0
        %417 = vmatpush1.bf16.msra.mxu0 0
        %418 = vmatprep.subr.bf16.mxu0 0
        %419 = vmatpush1.bf16.msra.mxu0 0
        %420 = vmatprep.subr.bf16.mxu0 0
        %421 = vmatpush1.bf16.msra.mxu0 0
        %422 = vmatprep.subr.bf16.mxu0 0
        %423 = vmatpush1.bf16.msra.mxu0 %v406
        %424 = vmatprep.subr.bf16.mxu0 0
        %425 = vmatpush2.bf16.msra.mxu0 0
        %426 = vmatprep.subr.bf16.mxu0 0
        %427 = vmatpush2.bf16.msra.mxu0 0
        %428 = vmatprep.subr.bf16.mxu0 0
        %429 = vmatpush2.bf16.msra.mxu0 0
        %430 = vmatprep.subr.bf16.mxu0 0
        %431 = vmatpush2.bf16.msra.mxu0 0
        %432 = vmatprep.subr.bf16.mxu0 0
        %433 = vmatpush2.bf16.msra.mxu0 0
        %434 = vmatprep.subr.bf16.mxu0 0
        %435 = vmatpush2.bf16.msra.mxu0 0
        %436 = vmatprep.subr.bf16.mxu0 0
        %437 = vmatpush2.bf16.msra.mxu0 0
        %438 = vmatprep.subr.bf16.mxu0 0
        %439 = vmatpush2.bf16.msra.mxu0 0
        %440 = vmatprep.mubr.bf16.mxu0 0
        %441 = vmatmul.mubr.bf16.gmra.mxu0 %v402
        %v442 = vpop.f32.mrf.mxu0
        %v443 = vadd.f32 0.0, %v442
        %v444 = vpop.f32.mrf.mxu0
        %v445 = vpop.f32.mrf.mxu0
        %v446 = vpop.f32.mrf.mxu0
        %447 = vdwg.mxu0
        %v448 = vrcp.pop %v397
        %v449 = vmul.f32 %v443, %v448
        %v450 = vpack.c.bf16 %v449, %v449
        %vm451 = vcmask 60416
        %452 = vst.msk [vmem:[%s239] sm:$0xf] %vm451, %v450
        %s453 = sand.u32 %s144, 1
        %s454 = scalar_lea.sflag [#allocation3], %s453
        %s455 = sand.u32 %s144, 1
        %s456 = smul.addr %s455, 4
        %s457 = scalar_lea.vmem [#allocation2], %s456
        // Predicated region
        $region37: #{tpu_custom_call.1} parent=35 // pred_check
          %p458 = pneg %p154
        $region38: #{tpu_custom_call.1} parent=35 // pred_check_branch
          %460 = sbr.rel (%p458) target = $region40
        $region39: #{tpu_custom_call.1} parent=35 // pred_region
          %s462 = ssub.s32 64, 64
          %463 = vsyncadd %s454, %s462
          %s464 = smul.addr %s22, 4
          %s465 = sadd.s32 %s23, %s464
          %s466 = smul.addr %s465, 64
          %s467 = scalar_lea.hbm %s4, %s466
          %s469 = sshll.u32 %s457, 4
          %s470 = int_to_ptr.vmem [resolvable:$true] %s469
          %472 = dma.vmem_to_hbm [thread:$0]  %s470, 64, %s467, %s454
        $region40: #{tpu_custom_call.1} parent=35 // pred_fallthru
          _
      $region36: #{tpu_custom_call.1} parent=5 // pred_fallthru
        _
      %p473 = scmp.le.s32.totalorder 2, %s13
      // Predicated region
      $region41: #{tpu_custom_call.1} parent=5 // pred_check
        %p474 = pneg %p473
      $region42: #{tpu_custom_call.1} parent=5 // pred_check_branch
        %476 = sbr.rel (%p474) target = $region44
      $region43: #{tpu_custom_call.1} parent=5 // pred_region
        %s477 = ssub.s32 %s13, 2
        // Predicated region
        $region45: #{tpu_custom_call.1} parent=43 // pred_check
          %p478 = pneg %p160
        $region46: #{tpu_custom_call.1} parent=43 // pred_check_branch
          %480 = sbr.rel (%p478) target = $region48
        $region47: #{tpu_custom_call.1} parent=43 // pred_region
          %s481 = sand.u32 %s145, 1
          %s482 = scalar_lea.sflag [#allocation3], %s481
          %s483 = sand.u32 %s145, 1
          %s484 = smul.addr %s483, 4
          %s485 = scalar_lea.vmem [#allocation2], %s484
          %486 = dma.done %s482, 64
        $region48: #{tpu_custom_call.1} parent=43 // pred_fallthru
          _
      $region44: #{tpu_custom_call.1} parent=5 // pred_fallthru
        _
    $region6: #{tpu_custom_call.1} parent=1 // loop_footer
      %s17 = sadd.s32 1, %s13
    $region7: #{tpu_custom_call.1} parent=1 // loop_footer_branch
      %12 = sbr.rel target = $region3
    $region8: #{tpu_custom_call.1} parent=1 // loop_exit
      _
    %487 = vsyncpa [#allocation3], 1
    %s488 = scalar_lea.sflag [#allocation3], 1
    %489 = vsyncpa %s488, 1

</llo_original>
